<compile_context>
chip_gen: v7x
topology: tpu7x:2x2x1
jax: 0.10.0
libtpu: 0.0.40
codegen_flags: <defaults>
</compile_context>

<pallas_src>
import functools

import jax
import jax.numpy as jnp
import numpy as np
from jax.experimental import pallas as pl
from jax.experimental.pallas import tpu as pltpu


def modulation_kernel(x_ref, t_ref, w_ref, b_ref, o_ref, *, tile_h,
                      weight_resident):
    hj = pl.program_id(1)

    # silu(time) in f32 (exact sigmoid; exp lands on the EUP and the kernel is
    # HBM-bound so this is free), then cast to the weight dtype so the MXU
    # runs its native (bf16) path; preferred_element_type keeps f32 accum.
    t = t_ref[...].astype(jnp.float32)
    silu_t = (t / (1.0 + jnp.exp(-t))).astype(w_ref.dtype)

    # Fused weight slab for this H-tile: (T, 2*tile_h), columns pre-interleaved
    # so [:tile_h] is the shift half and [tile_h:] the scale half.
    w = w_ref[hj] if weight_resident else w_ref[...]
    b = b_ref[hj].astype(jnp.float32)          # (1, 2*tile_h), '+1' pre-folded

    y = jnp.dot(silu_t, w, preferred_element_type=jnp.float32) + b
    shift = y[:, :tile_h]
    scale = y[:, tile_h:]                      # already == torch scale + 1

    x = x_ref[...].astype(jnp.float32)
    o_ref[...] = (x * scale + shift).astype(o_ref.dtype)


def pick_tiles(B, H, T, *, x_bytes=4, t_bytes=4, w_bytes=2,
               vmem_budget_bytes=40 * 1024 * 1024):
    """Pick (tile_b, tile_h, weight_resident) that fit the VMEM budget.

    The defaults (40 MiB budget, used with vmem_limit_bytes=48 MiB) are safe on
    v7x's 64 MiB per-TC VMEM; on v5e/v6e (128 MiB) pass a larger budget to grow
    tiles toward the 512-1024 roofline sweet spot.
    """
    h_cands = [c for c in (1024, 512, 256, 128) if H % c == 0] or [H]
    b_cands = [c for c in (2048, 1024, 512, 256, 128, 64, 32, 16, 8)
               if B % c == 0] or [B]
    # Keep the whole fused weight VMEM-resident when it is small (typical DiT).
    weight_resident = T * 2 * H * w_bytes <= 8 * 1024 * 1024

    def est(tb, th):
        e = 2 * 2 * tb * th * x_bytes                    # x + out double-buffers
        e += 2 * tb * T * t_bytes                        # time tile
        e += 2 * (T * 2 * H if weight_resident else T * 2 * th) * w_bytes
        e += 8 * 2 * H * 4                               # fused bias (padded)
        e += tb * 2 * th * 4                             # f32 matmul intermediate
        return e

    for th in h_cands:
        for tb in b_cands:
            if est(tb, th) <= vmem_budget_bytes:
                # v7x has 2 TensorCores: keep the leading (batch) grid axis
                # shardable instead of collapsing it to extent 1.
                if B // tb == 1 and tb >= 16 and (tb // 2) % 8 == 0:
                    tb //= 2
                return tb, th, weight_resident
    raise ValueError(
        f"No (tile_b, tile_h) for B={B}, H={H}, T={T} fits the "
        f"{vmem_budget_bytes}-byte VMEM budget; pass smaller explicit tiles.")


def prepare_modulation_params(weight_t, bias, tile_h, *,
                              weight_dtype=jnp.bfloat16):
    """One-time (per-parameter) prep — hoist this out of the per-step forward.

    Interleaves shift/scale weight columns per H-tile into (n_h, T, 2*tile_h),
    casts to the MXU input dtype (bf16 recommended), and folds modulate's '+1'
    into the scale half of the (f32) fused bias.
    """
    T, H2 = weight_t.shape
    H = H2 // 2
    assert H2 == 2 * H and bias.shape == (2 * H,) and H % tile_h == 0
    n_h = H // tile_h
    w_shift = weight_t[:, :H].reshape(T, n_h, tile_h)
    w_scale = weight_t[:, H:].reshape(T, n_h, tile_h)
    w_fused = (jnp.concatenate([w_shift, w_scale], axis=-1)   # (T, n_h, 2*tile_h)
               .transpose(1, 0, 2)                            # (n_h, T, 2*tile_h)
               .astype(weight_dtype))
    b_shift = bias[:H].reshape(n_h, 1, tile_h)
    b_scale = bias[H:].reshape(n_h, 1, tile_h) + 1.0          # fold modulate's +1
    b_fused = jnp.concatenate([b_shift, b_scale], axis=-1).astype(jnp.float32)
    return w_fused, b_fused


def modulation_forward(x, time, w_fused, b_fused, *, tile_b, tile_h,
                       weight_resident=True, donate_x=False,
                       vmem_limit_bytes=48 * 1024 * 1024):
    """DiT modulation forward with pre-fused params (prepare_modulation_params).

    x: (B, H); time: (B, T); w_fused: (n_h, T, 2*tile_h); b_fused: (n_h, 1, 2*tile_h).
    donate_x=True aliases the output onto x's HBM buffer — only safe when the
    caller never reads x afterwards.
    """
    B, H = x.shape
    T = time.shape[-1]
    assert time.shape == (B, T)
    assert H % tile_h == 0 and B % tile_b == 0
    n_b, n_h = B // tile_b, H // tile_h
    assert w_fused.shape == (n_h, T, 2 * tile_h)
    assert b_fused.shape == (n_h, 1, 2 * tile_h)

    kernel = functools.partial(modulation_kernel, tile_h=tile_h,
                               weight_resident=weight_resident)

    if weight_resident:
        # Whole fused weight stays VMEM-resident (constant block index); the
        # kernel indexes its H-tile slab along the leading dim.
        w_spec = pl.BlockSpec((n_h, T, 2 * tile_h), lambda bi, hj: (0, 0, 0))
    else:
        # Streamed per H-tile (leading dim squeezed away).
        w_spec = pl.BlockSpec((None, T, 2 * tile_h), lambda bi, hj: (hj, 0, 0))
    b_spec = pl.BlockSpec((n_h, 1, 2 * tile_h), lambda bi, hj: (0, 0, 0))

    extra = {}
    if donate_x:
        extra["input_output_aliases"] = {0: 0}

    return pl.pallas_call(
        kernel,
        out_shape=jax.ShapeDtypeStruct((B, H), x.dtype),
        # bi (batch) leading: big, shardable across v7x's 2 TensorCores; with
        # hj innermost, the time block (indexed by bi only) is DMA'd exactly
        # once per batch tile — no redundant HBM traffic.
        grid=(n_b, n_h),
        in_specs=[
            pl.BlockSpec((tile_b, tile_h), lambda bi, hj: (bi, hj)),  # x
            pl.BlockSpec((tile_b, T), lambda bi, hj: (bi, 0)),        # time
            w_spec,                                                    # fused W
            b_spec,                                                    # fused b
        ],
        out_specs=pl.BlockSpec((tile_b, tile_h), lambda bi, hj: (bi, hj)),
        compiler_params=pltpu.CompilerParams(
            dimension_semantics=("parallel", "parallel"),
            vmem_limit_bytes=vmem_limit_bytes,
        ),
        **extra,
    )(x, time, w_fused, b_fused)


def modulation_ref(x, time, weight_t, bias):
    H = x.shape[-1]
    silu_t = time * jax.nn.sigmoid(time)
    y = silu_t @ weight_t + bias
    shift, scale = y[:, :H], y[:, H:]
    return x * (scale + 1.0) + shift


if __name__ == "__main__":
    key = jax.random.PRNGKey(0)
    kx, kt, kw, kb = jax.random.split(key, 4)

    # Small but lane-dense DiT-ish shapes: 64 tokens, hidden=256, time_dim=64.
    B, H, T = 64, 256, 64
    x = jax.random.normal(kx, (B, H), dtype=jnp.float32)
    time = jax.random.normal(kt, (B, T), dtype=jnp.float32)

    # NOTE: the PyTorch module zero-inits the Linear, making the forward an
    # identity.  Use deterministic *nonzero* parameters here to exercise the
    # silu/matmul path; the zero-init case is checked separately below.
    weight_t = 0.02 * jax.random.normal(kw, (T, 2 * H), dtype=jnp.float32)
    bias = 0.02 * jax.random.normal(kb, (2 * H,), dtype=jnp.float32)

    ref = modulation_ref(x, time, weight_t, bias)

    # (1) Auto tiles, bf16 fused weight, resident-W path; prep hoisted + jit'd.
    tile_b, tile_h, w_res = pick_tiles(B, H, T)
    w_bf16, b_f = prepare_modulation_params(weight_t, bias, tile_h)
    fwd = jax.jit(functools.partial(modulation_forward, tile_b=tile_b,
                                    tile_h=tile_h, weight_resident=w_res))
    out = jax.block_until_ready(fwd(x, time, w_bf16, b_f))
    np.testing.assert_allclose(np.asarray(out), np.asarray(ref),
                               rtol=1e-2, atol=2e-2)   # bf16 weight/MXU rounding

    # (2) Multi-tile grid on both axes + streamed-W path, f32 weights for a
    #     tighter parity check.
    w_f32, b_f32 = prepare_modulation_params(weight_t, bias, 128,
                                             weight_dtype=jnp.float32)
    out2 = jax.block_until_ready(
        modulation_forward(x, time, w_f32, b_f32, tile_b=16, tile_h=128,
                           weight_resident=False))
    np.testing.assert_allclose(np.asarray(out2), np.asarray(ref),
                               rtol=2e-3, atol=2e-3)

    # (3) Zero-init (faithful to the module's __init__): forward must be x exactly.
    wz, bz = prepare_modulation_params(jnp.zeros((T, 2 * H), jnp.float32),
                                       jnp.zeros((2 * H,), jnp.float32), tile_h)
    out_zero = jax.block_until_ready(
        modulation_forward(x, time, wz, bz, tile_b=tile_b, tile_h=tile_h,
                           weight_resident=w_res))
    np.testing.assert_allclose(np.asarray(out_zero), np.asarray(x), rtol=0, atol=0)

    print("KERNEL_OK")
</pallas_src>

<mosaic_0001>
module attributes {stable_mosaic.version = 11 : i64} {
  func.func @modulation_kernel(%arg0: i32, %arg1: i32, %arg2: memref<32x256xf32, #tpu.memory_space<vmem>>, %arg3: memref<32x64xf32, #tpu.memory_space<vmem>>, %arg4: memref<1x64x512xbf16, #tpu.memory_space<vmem>>, %arg5: memref<1x1x512xf32, #tpu.memory_space<vmem>>, %arg6: memref<32x256xf32, #tpu.memory_space<vmem>>) attributes {dimension_semantics = [#tpu.dimension_semantics<parallel>, #tpu.dimension_semantics<parallel>], iteration_bounds = array<i64: 2, 1>, scalar_prefetch = 0 : i64, scratch_operands = 0 : i64, tpu.core_type = #tpu.core_type<tc>, window_params = [{transform_indices = @transform_0, window_bounds = array<i64: 32, 256>}, {transform_indices = @transform_1, window_bounds = array<i64: 32, 64>}, {pipeline_mode = #tpu.pipeline_mode<synchronous>, transform_indices = @transform_2, window_bounds = array<i64: 1, 64, 512>}, {pipeline_mode = #tpu.pipeline_mode<synchronous>, transform_indices = @transform_3, window_bounds = array<i64: 1, 1, 512>}, {transform_indices = @transform_4, window_bounds = array<i64: 32, 256>}]} {
    %c0 = arith.constant 0 : index
    %c0_0 = arith.constant 0 : index
    %0 = vector.load %arg3[%c0, %c0_0] : memref<32x64xf32, #tpu.memory_space<vmem>>, vector<32x64xf32>
    %cst = arith.constant 0.000000e+00 : f32
    %1 = vector.broadcast %cst : f32 to vector<32x64xf32>
    %2 = arith.subf %1, %0 : vector<32x64xf32>
    %3 = math.exp %2 : vector<32x64xf32>
    %cst_1 = arith.constant 1.000000e+00 : f32
    %4 = vector.broadcast %cst_1 : f32 to vector<32x64xf32>
    %5 = arith.addf %4, %3 : vector<32x64xf32>
    %6 = arith.divf %0, %5 : vector<32x64xf32>
    %7 = arith.truncf %6 : vector<32x64xf32> to vector<32x64xbf16>
    %8 = arith.index_cast %arg1 : i32 to index
    %c0_2 = arith.constant 0 : index
    %c0_3 = arith.constant 0 : index
    %9 = vector.load %arg4[%8, %c0_2, %c0_3] : memref<1x64x512xbf16, #tpu.memory_space<vmem>>, vector<1x64x512xbf16>
    %10 = vector.shape_cast %9 : vector<1x64x512xbf16> to vector<64x512xbf16>
    %11 = arith.index_cast %arg1 : i32 to index
    %c0_4 = arith.constant 0 : index
    %c0_5 = arith.constant 0 : index
    %12 = vector.load %arg5[%11, %c0_4, %c0_5] : memref<1x1x512xf32, #tpu.memory_space<vmem>>, vector<1x1x512xf32>
    %13 = vector.shape_cast %12 : vector<1x1x512xf32> to vector<1x512xf32>
    %cst_6 = arith.constant dense<0.000000e+00> : vector<32x512xf32>
    %14 = tpu.matmul %7, %10, %cst_6 {dimension_numbers = #tpu.dot_dimension_numbers<[1], [0], [0], [1], [0, 0, 1, 1], [], []>} : vector<32x64xbf16>, vector<64x512xbf16>, vector<32x512xf32> -> vector<32x512xf32>
    %15 = vector.broadcast %13 : vector<1x512xf32> to vector<32x512xf32>
    %16 = arith.addf %14, %15 : vector<32x512xf32>
    %17 = vector.extract_strided_slice %16 {offsets = [0, 0], sizes = [32, 256], strides = [1, 1]} : vector<32x512xf32> to vector<32x256xf32>
    %18 = vector.extract_strided_slice %16 {offsets = [0, 256], sizes = [32, 256], strides = [1, 1]} : vector<32x512xf32> to vector<32x256xf32>
    %c0_7 = arith.constant 0 : index
    %c0_8 = arith.constant 0 : index
    %19 = vector.load %arg2[%c0_7, %c0_8] : memref<32x256xf32, #tpu.memory_space<vmem>>, vector<32x256xf32>
    %20 = arith.mulf %19, %18 : vector<32x256xf32>
    %21 = arith.addf %20, %17 : vector<32x256xf32>
    %c0_9 = arith.constant 0 : index
    %c0_10 = arith.constant 0 : index
    %22 = vector.load %arg6[%c0_9, %c0_10] : memref<32x256xf32, #tpu.memory_space<vmem>>, vector<32x256xf32>
    tpu.vector_store %arg6[%c0_9, %c0_10], %21 {strides = array<i32>} : memref<32x256xf32, #tpu.memory_space<vmem>>, vector<32x256xf32>,
    return
  }
  func.func @transform_0(%arg0: i32, %arg1: i32) -> (i32, i32) {
    %c0_i32 = arith.constant 0 : i32
    return %arg0, %arg1 : i32, i32
  }
  func.func @transform_1(%arg0: i32, %arg1: i32) -> (i32, i32) {
    %c0_i32 = arith.constant 0 : i32
    %c0_i32_0 = arith.constant 0 : i32
    return %arg0, %c0_i32 : i32, i32
  }
  func.func @transform_2(%arg0: i32, %arg1: i32) -> (i32, i32, i32) {
    %c0_i32 = arith.constant 0 : i32
    %c0_i32_0 = arith.constant 0 : i32
    %c0_i32_1 = arith.constant 0 : i32
    %c0_i32_2 = arith.constant 0 : i32
    return %c0_i32, %c0_i32_0, %c0_i32_1 : i32, i32, i32
  }
  func.func @transform_3(%arg0: i32, %arg1: i32) -> (i32, i32, i32) {
    %c0_i32 = arith.constant 0 : i32
    %c0_i32_0 = arith.constant 0 : i32
    %c0_i32_1 = arith.constant 0 : i32
    %c0_i32_2 = arith.constant 0 : i32
    return %c0_i32, %c0_i32_0, %c0_i32_1 : i32, i32, i32
  }
  func.func @transform_4(%arg0: i32, %arg1: i32) -> (i32, i32) {
    %c0_i32 = arith.constant 0 : i32
    return %arg0, %arg1 : i32, i32
  }
}

</mosaic_0001>

<llo_original>
// kernel: modulation_forward.1
$region0: #{modulation_forward.1}
  #allocation0 [shape = 'u32[]', space=smem, size = 0x4, offset = 0x4, fixed_abs, tag = 'smem constant byte address 0x4 - core index']
  #allocation1 [shape = 'u32[144,128]{1,0:T(1,128)}', space=vmem, size = 0x12000, scoped, tag = 'internal scratch']
  %s0 = inlined_call_operand.hbm [shape: f32[64,256], index: 0, kind: input, shape index: {}]
  %s1 = inlined_call_operand.hbm [shape: f32[64,64], index: 1, kind: input, shape index: {}]
  %s2 = inlined_call_operand.hbm [shape: bf16[1,64,512], index: 2, kind: input, shape index: {}]
  %s3 = inlined_call_operand.vmem [shape: f32[1,1,512], index: 3, kind: input, shape index: {}]
  %s4 = inlined_call_operand.hbm [shape: f32[64,256], index: 4, kind: output, shape index: {}]
  %s5 = sld [smem:[#allocation0]]
  $region61: #{modulation_forward.1} parent=0
    _
  %s7 = ssub.s32 1, %s5
  %s8 = scalar_select 0, %s7, %s5
  $region1: #{modulation_forward.1} parent=0
    #allocation2 [shape = 'u8[65536]{0}', space=vmem, size = 0x10000, scoped, tag = 'input window, operand 0']
    #allocation3 [shape = 's32[2]{0}', space=sflag, size = 0x8, scoped, tag = 'scoped memory for modulation_forward.1']
    #allocation4 [shape = 's32[2]{0}', space=sflag, size = 0x8, scoped, tag = 'scoped memory for modulation_forward.1']
    #allocation5 [shape = 'u8[32768]{0}', space=vmem, size = 0x8000, scoped, tag = 'input window, operand 1']
    #allocation6 [shape = 's32[2]{0}', space=sflag, size = 0x8, scoped, tag = 'scoped memory for modulation_forward.1']
    #allocation7 [shape = 'u8[65536]{0}', space=vmem, size = 0x10000, scoped, tag = 'input window, operand 2, single buffered']
    #allocation8 [shape = 'u8[65536]{0}', space=vmem, size = 0x10000, scoped, tag = 'output window, operand 0']
    %9 = vsyncpa [#allocation3], 0
    %s10 = scalar_lea.sflag [#allocation3], 1
    %11 = vsyncpa %s10, 0
    %12 = vsyncpa [#allocation6], 0
    %s13 = scalar_lea.sflag [#allocation6], 1
    %14 = vsyncpa %s13, 0
    %15 = vsyncpa [#allocation4], 0
    %s16 = scalar_lea.sflag [#allocation4], 1
    %17 = vsyncpa %s16, 0
    loop: start=0, step=1, limit=4
    $region2: #{modulation_forward.1} parent=1 // loop_pre_header
      _
    $region3: #{modulation_forward.1} parent=1 // loop_header
      %s19 = sphi 0, %s23
      %p20 = scmp.ge.s32.totalorder %s19, 4
      %s26 = sphi 0, %s38
      %s27 = sphi 0, %s34
      %s28 = sphi 0, %s26
      %s29 = sphi 0, %s27
      %s30 = sphi 0, %s28
      %s31 = sphi 0, %s29
      %s43 = sphi 0, %s45
      %s46 = sphi 0, %s43
      %s47 = sphi 0, %s46
      %s63 = sphi 0, %s47
      %s69 = sphi 0, %s71
      %s72 = sphi 0, %s69
      %s73 = sphi 0, %s72
      %s89 = sphi 0, %s73
      %s93 = sphi 0, %s93
      %s95 = sphi 0, %s93
      %s96 = sphi 0, %s95
      %s110 = sphi 0, %s96
      %s114 = sphi 0, %s114
      %s116 = sphi 0, %s114
      %s117 = sphi 0, %s116
      %s131 = sphi 0, %s117
      %s139 = sphi 0, %s141
      %s142 = sphi 0, %s139
      %s143 = sphi 0, %s142
      %s159 = sphi 0, %s143
    $region4: #{modulation_forward.1} parent=1 // loop_header_branch
      %22 = sbr.rel (%p20) target = $region8
    $region5: #{modulation_forward.1} parent=1 // loop_body
      %s24 = ssub.s32 %s19, 1
      %s25 = ssub.s32 %s19, 2
      %s32 = sadd.s32 1, %s27
      %p33 = scmp.ge.s32.totalorder %s32, 1
      %s34 = scalar_select %p33, 0, %s32
      %s35 = sadd.s32 1, %s26
      %s36 = scalar_select %p33, %s35, %s26
      %p37 = scmp.ge.s32.totalorder %s36, 2
      %s38 = scalar_select %p37, 0, %s36
      %s39 = ssub.s32 %s26, %s38
      %s40 = ssub.s32 %s27, %s34
      %s41 = sor.u32 %s39, %s40
      %p42 = scmp.eq.s32.totalorder %s41, 0
      %s44 = sadd.s32 %s43, 1
      %s45 = scalar_select %p42, %s43, %s44
      %p48 = pneg %p42
      %p49 = scmp.eq.s32.totalorder %s19, 1
      %p50 = por %p48, %p49
      %p51 = scmp.ne.s32.totalorder %s43, %s46
      %p52 = scmp.eq.s32.totalorder %s19, 0
      %p53 = por %p51, %p52
      %p54 = scmp.ne.s32.totalorder %s43, %s46
      %p55 = scmp.eq.s32.totalorder %s24, 1
      %p56 = por %p54, %p55
      %p57 = scmp.ne.s32.totalorder %s46, %s47
      %p58 = scmp.eq.s32.totalorder %s24, 0
      %p59 = por %p57, %p58
      %p60 = scmp.ne.s32.totalorder %s46, %s47
      %p61 = scmp.eq.s32.totalorder %s25, 1
      %p62 = por %p60, %p61
      %p64 = scmp.ne.s32.totalorder %s47, %s63
      %p65 = scmp.eq.s32.totalorder %s25, 0
      %p66 = por %p64, %p65
      %s67 = ssub.s32 %s26, %s38
      %p68 = scmp.eq.s32.totalorder %s67, 0
      %s70 = sadd.s32 %s69, 1
      %s71 = scalar_select %p68, %s69, %s70
      %p74 = pneg %p68
      %p75 = scmp.eq.s32.totalorder %s19, 1
      %p76 = por %p74, %p75
      %p77 = scmp.ne.s32.totalorder %s69, %s72
      %p78 = scmp.eq.s32.totalorder %s19, 0
      %p79 = por %p77, %p78
      %p80 = scmp.ne.s32.totalorder %s69, %s72
      %p81 = scmp.eq.s32.totalorder %s24, 1
      %p82 = por %p80, %p81
      %p83 = scmp.ne.s32.totalorder %s72, %s73
      %p84 = scmp.eq.s32.totalorder %s24, 0
      %p85 = por %p83, %p84
      %p86 = scmp.ne.s32.totalorder %s72, %s73
      %p87 = scmp.eq.s32.totalorder %s25, 1
      %p88 = por %p86, %p87
      %p90 = scmp.ne.s32.totalorder %s73, %s89
      %p91 = scmp.eq.s32.totalorder %s25, 0
      %p92 = por %p90, %p91
      %s94 = sadd.s32 %s93, 1
      %p97 = scmp.eq.s32.totalorder %s19, 1
      %p98 = scmp.ne.s32.totalorder %s93, %s95
      %p99 = scmp.eq.s32.totalorder %s19, 0
      %p100 = por %p98, %p99
      %p101 = scmp.ne.s32.totalorder %s93, %s95
      %p102 = scmp.eq.s32.totalorder %s24, 1
      %p103 = por %p101, %p102
      %p104 = scmp.ne.s32.totalorder %s95, %s96
      %p105 = scmp.eq.s32.totalorder %s24, 0
      %p106 = por %p104, %p105
      %p107 = scmp.ne.s32.totalorder %s95, %s96
      %p108 = scmp.eq.s32.totalorder %s25, 1
      %p109 = por %p107, %p108
      %p111 = scmp.ne.s32.totalorder %s96, %s110
      %p112 = scmp.eq.s32.totalorder %s25, 0
      %p113 = por %p111, %p112
      %s115 = sadd.s32 %s114, 1
      %p118 = scmp.eq.s32.totalorder %s19, 1
      %p119 = scmp.ne.s32.totalorder %s114, %s116
      %p120 = scmp.eq.s32.totalorder %s19, 0
      %p121 = por %p119, %p120
      %p122 = scmp.ne.s32.totalorder %s114, %s116
      %p123 = scmp.eq.s32.totalorder %s24, 1
      %p124 = por %p122, %p123
      %p125 = scmp.ne.s32.totalorder %s116, %s117
      %p126 = scmp.eq.s32.totalorder %s24, 0
      %p127 = por %p125, %p126
      %p128 = scmp.ne.s32.totalorder %s116, %s117
      %p129 = scmp.eq.s32.totalorder %s25, 1
      %p130 = por %p128, %p129
      %p132 = scmp.ne.s32.totalorder %s117, %s131
      %p133 = scmp.eq.s32.totalorder %s25, 0
      %p134 = por %p132, %p133
      %s135 = ssub.s32 %s26, %s38
      %s136 = ssub.s32 %s27, %s34
      %s137 = sor.u32 %s135, %s136
      %p138 = scmp.eq.s32.totalorder %s137, 0
      %s140 = sadd.s32 %s139, 1
      %s141 = scalar_select %p138, %s139, %s140
      %p144 = pneg %p138
      %p145 = scmp.eq.s32.totalorder %s19, 1
      %p146 = por %p144, %p145
      %p147 = scmp.ne.s32.totalorder %s139, %s142
      %p148 = scmp.eq.s32.totalorder %s19, 0
      %p149 = por %p147, %p148
      %p150 = scmp.ne.s32.totalorder %s139, %s142
      %p151 = scmp.eq.s32.totalorder %s24, 1
      %p152 = por %p150, %p151
      %p153 = scmp.ne.s32.totalorder %s142, %s143
      %p154 = scmp.eq.s32.totalorder %s24, 0
      %p155 = por %p153, %p154
      %p156 = scmp.ne.s32.totalorder %s142, %s143
      %p157 = scmp.eq.s32.totalorder %s25, 1
      %p158 = por %p156, %p157
      %p160 = scmp.ne.s32.totalorder %s143, %s159
      %p161 = scmp.eq.s32.totalorder %s25, 0
      %p162 = por %p160, %p161
      %p163 = scmp.le.s32.totalorder 1, %s19
      %p164 = scmp.lt.s32.totalorder %s19, 3
      %p165 = pnand %p163, %p164
      %p166 = pneg %p165
      // Predicated region
      $region9: #{modulation_forward.1} parent=5 // pred_check
        _
      $region10: #{modulation_forward.1} parent=5 // pred_check_branch
        %168 = sbr.rel (%p165) target = $region12
      $region11: #{modulation_forward.1} parent=5 // pred_region
        %s169 = ssub.s32 %s19, 1
        // Predicated region
        $region13: #{modulation_forward.1} parent=11 // pred_check
          %p170 = pneg %p106
        $region14: #{modulation_forward.1} parent=11 // pred_check_branch
          %172 = sbr.rel (%p170) target = $region16
        $region15: #{modulation_forward.1} parent=11 // pred_region
          %s174 = ssub.s32 2048, 2048
          %175 = vsyncadd [#allocation6], %s174
          %s176 = sshll.u32 [#allocation7], 4
          %s177 = int_to_ptr.vmem [resolvable:$true] %s176
          %182 = dma.hbm_to_vmem [thread:$0]  %s2, 2048, %s177, [#allocation6], 256, 256, 16
        $region16: #{modulation_forward.1} parent=11 // pred_fallthru
          _
        // Predicated region
        $region17: #{modulation_forward.1} parent=11 // pred_check
          %p183 = pneg %p127
        $region18: #{modulation_forward.1} parent=11 // pred_check_branch
          %185 = sbr.rel (%p183) target = $region20
        $region19: #{modulation_forward.1} parent=11 // pred_region
          _
        $region20: #{modulation_forward.1} parent=11 // pred_fallthru
          _
      $region12: #{modulation_forward.1} parent=5 // pred_fallthru
        _
      %p186 = scmp.lt.s32.totalorder %s19, 2
      // Predicated region
      $region21: #{modulation_forward.1} parent=5 // pred_check
        %p187 = pneg %p186
      $region22: #{modulation_forward.1} parent=5 // pred_check_branch
        %189 = sbr.rel (%p187) target = $region24
      $region23: #{modulation_forward.1} parent=5 // pred_region
        // Predicated region
        $region25: #{modulation_forward.1} parent=23 // pred_check
          %p190 = pneg %p53
        $region26: #{modulation_forward.1} parent=23 // pred_check_branch
          %192 = sbr.rel (%p190) target = $region28
        $region27: #{modulation_forward.1} parent=23 // pred_region
          %s193 = sand.u32 %s43, 1
          %s194 = scalar_lea.sflag [#allocation3], %s193
          %s195 = sand.u32 %s43, 1
          %s196 = smul.addr %s195, 64
          %s197 = scalar_lea.vmem [#allocation2], %s196
          %s198 = smul.u32 4, %s26
          %s199 = smul.u32 2, %s27
          %s201 = ssub.s32 1024, 1024
          %202 = vsyncadd %s194, %s201
          %s203 = smul.addr %s198, 2
          %s204 = sadd.s32 %s199, %s203
          %s205 = smul.addr %s204, 128
          %s206 = scalar_lea.hbm %s0, %s205
          %s207 = sshll.u32 %s197, 4
          %s208 = int_to_ptr.vmem [resolvable:$true] %s207
          %213 = dma.hbm_to_vmem [thread:$0]  %s206, 1024, %s208, %s194, 256, 256, 16
        $region28: #{modulation_forward.1} parent=23 // pred_fallthru
          _
        // Predicated region
        $region29: #{modulation_forward.1} parent=23 // pred_check
          %p214 = pneg %p79
        $region30: #{modulation_forward.1} parent=23 // pred_check_branch
          %216 = sbr.rel (%p214) target = $region32
        $region31: #{modulation_forward.1} parent=23 // pred_region
          %s217 = sand.u32 %s19, 1
          %s218 = scalar_lea.sflag [#allocation6], %s217
          %s219 = sand.u32 %s69, 1
          %s220 = smul.addr %s219, 32
          %s221 = scalar_lea.vmem [#allocation5], %s220
          %s222 = smul.u32 4, %s26
          %s224 = ssub.s32 512, 512
          %225 = vsyncadd %s218, %s224
          %s226 = smul.addr %s222, 128
          %s227 = scalar_lea.hbm %s1, %s226
          %s228 = sshll.u32 %s221, 4
          %s229 = int_to_ptr.vmem [resolvable:$true] %s228
          %234 = dma.hbm_to_vmem [thread:$0]  %s227, 512, %s229, %s218, 128, 128, 8
        $region32: #{modulation_forward.1} parent=23 // pred_fallthru
          _
      $region24: #{modulation_forward.1} parent=5 // pred_fallthru
        _
      %p235 = scmp.le.s32.totalorder 1, %s19
      %p236 = scmp.lt.s32.totalorder %s19, 3
      %p237 = pnand %p235, %p236
      %p238 = pneg %p237
      // Predicated region
      $region33: #{modulation_forward.1} parent=5 // pred_check
        _
      $region34: #{modulation_forward.1} parent=5 // pred_check_branch
        %240 = sbr.rel (%p237) target = $region36
      $region35: #{modulation_forward.1} parent=5 // pred_region
        %s241 = ssub.s32 %s19, 1
        %s242 = sand.u32 %s46, 1
        %s243 = scalar_lea.sflag [#allocation3], %s242
        %s244 = sand.u32 %s46, 1
        %s245 = smul.addr %s244, 64
        %s246 = scalar_lea.vmem [#allocation2], %s245
        // Predicated region
        $region37: #{modulation_forward.1} parent=35 // pred_check
          %p247 = pneg %p59
        $region38: #{modulation_forward.1} parent=35 // pred_check_branch
          %249 = sbr.rel (%p247) target = $region40
        $region39: #{modulation_forward.1} parent=35 // pred_region
          %250 = dma.done %s243, 1024
        $region40: #{modulation_forward.1} parent=35 // pred_fallthru
          _
        %s251 = sand.u32 %s24, 1
        %s252 = scalar_lea.sflag [#allocation6], %s251
        %s253 = sand.u32 %s72, 1
        %s254 = smul.addr %s253, 32
        %s255 = scalar_lea.vmem [#allocation5], %s254
        // Predicated region
        $region41: #{modulation_forward.1} parent=35 // pred_check
          %p256 = pneg %p85
        $region42: #{modulation_forward.1} parent=35 // pred_check_branch
          %258 = sbr.rel (%p256) target = $region44
        $region43: #{modulation_forward.1} parent=35 // pred_region
          %259 = dma.done %s252, 512
        $region44: #{modulation_forward.1} parent=35 // pred_fallthru
          _
        // Predicated region
        $region45: #{modulation_forward.1} parent=35 // pred_check
          %p260 = pneg %p106
        $region46: #{modulation_forward.1} parent=35 // pred_check_branch
          %262 = sbr.rel (%p260) target = $region48
        $region47: #{modulation_forward.1} parent=35 // pred_region
          %263 = dma.done [#allocation6], 2048
        $region48: #{modulation_forward.1} parent=35 // pred_fallthru
          _
        %s264 = sand.u32 %s46, 1
        %s265 = scalar_lea.sflag [#allocation3], %s264
        %s266 = sand.u32 %s46, 1
        %s267 = smul.addr %s266, 64
        %s268 = scalar_lea.vmem [#allocation2], %s267
        %p269 = pneg %p59
        %p270 = pneg %p56
        %s271 = sand.u32 %s24, 1
        %s272 = scalar_lea.sflag [#allocation6], %s271
        %s273 = sand.u32 %s72, 1
        %s274 = smul.addr %s273, 32
        %s275 = scalar_lea.vmem [#allocation5], %s274
        %p276 = pneg %p85
        %p277 = pneg %p82
        %p278 = pneg %p106
        %p279 = pneg %p103
        %p280 = pneg %p127
        %p281 = pneg %p124
        %p282 = pneg %p155
        %p283 = pneg %p152
        %s284 = sand.u32 %s142, 1
        %s285 = scalar_lea.sflag [#allocation4], %s284
        %s286 = sand.u32 %s142, 1
        %s287 = smul.addr %s286, 64
        %s288 = scalar_lea.vmem [#allocation8], %s287
        %s289 = smul.u32 4, %s28
        %s290 = smul.u32 2, %s29
        %s291 = smul.u32 4, %s28
        %s292 = smul.u32 4, %s28
        %s293 = smul.u32 2, %s29
        %v295 = vld [vmem:[%s255] sm:$0xff]
        %v296 = vld [vmem:[%s255 + $0x8] sm:$0xff]
        %v297 = vld [vmem:[%s255 + $0x10] sm:$0xff]
        %v298 = vld [vmem:[%s255 + $0x18] sm:$0xff]
        %v299 = vsub.f32 0.0, %v295
        %v300 = vsub.f32 0.0, %v296
        %v301 = vsub.f32 0.0, %v297
        %v302 = vsub.f32 0.0, %v298
        %v303 = vmul.f32 %v299, 1.442695
        %v304 = vpow.pop %v303
        %v305 = vmul.f32 %v300, 1.442695
        %v306 = vpow.pop %v305
        %v307 = vmul.f32 %v301, 1.442695
        %v308 = vpow.pop %v307
        %v309 = vmul.f32 %v302, 1.442695
        %v310 = vpow.pop %v309
        %v311 = vadd.f32 %v304, 1.0
        %v312 = vadd.f32 %v306, 1.0
        %v313 = vadd.f32 %v308, 1.0
        %v314 = vadd.f32 %v310, 1.0
        %v315 = vrcp.pop %v311
        %v316 = vmul.f32 %v295, %v315
        %v317 = vrcp.pop %v312
        %v318 = vmul.f32 %v296, %v317
        %v319 = vrcp.pop %v313
        %v320 = vmul.f32 %v297, %v319
        %v321 = vrcp.pop %v314
        %v322 = vmul.f32 %v298, %v321
        %v323 = vpack.c.bf16 %v318, %v316
        %v324 = vpack.c.bf16 %v322, %v320
        %s325 = smul.u32 %s29, 32
        %s326 = smul.addr %s325, 4
        %s327 = scalar_lea.vmem [#allocation7], %s326
        %v328 = vld [vmem:[%s327] sm:$0xff]
        %v329 = vld [vmem:[%s327 + $0x8] sm:$0xff]
        %v330 = vld [vmem:[%s327 + $0x10] sm:$0xff]
        %v331 = vld [vmem:[%s327 + $0x18] sm:$0xff]
        %v332 = vld [vmem:[%s327 + $0x20] sm:$0xff]
        %v333 = vld [vmem:[%s327 + $0x28] sm:$0xff]
        %v334 = vld [vmem:[%s327 + $0x30] sm:$0xff]
        %v335 = vld [vmem:[%s327 + $0x38] sm:$0xff]
        %v336 = vld [vmem:[%s327 + $0x40] sm:$0xff]
        %v337 = vld [vmem:[%s327 + $0x48] sm:$0xff]
        %v338 = vld [vmem:[%s327 + $0x50] sm:$0xff]
        %v339 = vld [vmem:[%s327 + $0x58] sm:$0xff]
        %v340 = vld [vmem:[%s327 + $0x60] sm:$0xff]
        %v341 = vld [vmem:[%s327 + $0x68] sm:$0xff]
        %v342 = vld [vmem:[%s327 + $0x70] sm:$0xff]
        %v343 = vld [vmem:[%s327 + $0x78] sm:$0xff]
        %s344 = smul.u32 %s29, 4
        %s345 = scalar_lea.vmem %s3, %s344
        %v346 = vld [vmem:[%s345] sm:$0xf]
        %v348 = vlaneseq
        %v349 = vshrl.u32 %v348, 7
        %v350 = vsub.s32 0, %v349
        %v351 = vrot.slane %v346, %v350
        %v352 = vlaneseq
        %v353 = vshrl.u32 %v352, 7
        %v354 = vsub.s32 1, %v353
        %v355 = vrot.slane %v346, %v354
        %v356 = vlaneseq
        %v357 = vshrl.u32 %v356, 7
        %v358 = vsub.s32 2, %v357
        %v359 = vrot.slane %v346, %v358
        %v360 = vlaneseq
        %v361 = vshrl.u32 %v360, 7
        %v362 = vsub.s32 3, %v361
        %v363 = vrot.slane %v346, %v362
        %v384 = vunpack.c.l.b16 %v328
        %v385 = vunpack.c.h.b16 %v328
        %v386 = vunpack.c.l.b16 %v329
        %v387 = vunpack.c.h.b16 %v329
        %v388 = vunpack.c.l.b16 %v330
        %v389 = vunpack.c.h.b16 %v330
        %v390 = vunpack.c.l.b16 %v331
        %v391 = vunpack.c.h.b16 %v331
        %v392 = vunpack.c.l.b16 %v332
        %v393 = vunpack.c.h.b16 %v332
        %v394 = vunpack.c.l.b16 %v333
        %v395 = vunpack.c.h.b16 %v333
        %v396 = vunpack.c.l.b16 %v334
        %v397 = vunpack.c.h.b16 %v334
        %v398 = vunpack.c.l.b16 %v335
        %v399 = vunpack.c.h.b16 %v335
        %v400 = vunpack.c.l.b16 %v336
        %v401 = vunpack.c.h.b16 %v336
        %v402 = vunpack.c.l.b16 %v337
        %v403 = vunpack.c.h.b16 %v337
        %v404 = vunpack.c.l.b16 %v338
        %v405 = vunpack.c.h.b16 %v338
        %v406 = vunpack.c.l.b16 %v339
        %v407 = vunpack.c.h.b16 %v339
        %v408 = vunpack.c.l.b16 %v340
        %v409 = vunpack.c.h.b16 %v340
        %v410 = vunpack.c.l.b16 %v341
        %v411 = vunpack.c.h.b16 %v341
        %v412 = vunpack.c.l.b16 %v342
        %v413 = vunpack.c.h.b16 %v342
        %v414 = vunpack.c.l.b16 %v343
        %v415 = vunpack.c.h.b16 %v343
        %v416 = vpack.c.b16 %v388, %v384
        %v417 = vpack.c.b16 %v389, %v385
        %v418 = vpack.c.b16 %v390, %v386
        %v419 = vpack.c.b16 %v391, %v387
        %v420 = vpack.c.b16 %v396, %v392
        %v421 = vpack.c.b16 %v397, %v393
        %v422 = vpack.c.b16 %v398, %v394
        %v423 = vpack.c.b16 %v399, %v395
        %v424 = vpack.c.b16 %v404, %v400
        %v425 = vpack.c.b16 %v405, %v401
        %v426 = vpack.c.b16 %v406, %v402
        %v427 = vpack.c.b16 %v407, %v403
        %v428 = vpack.c.b16 %v412, %v408
        %v429 = vpack.c.b16 %v413, %v409
        %v430 = vpack.c.b16 %v414, %v410
        %v431 = vpack.c.b16 %v415, %v411
        %vm448 = vcmask 523264
        %v450 = vsel %vm448, %v323, 0
        %v453 = vsel %vm448, %v324, 0
        %455 = vmatprep.subr.bf16.mxu0 %v417
        %456 = vmatpush1.bf16.msra.mxu0 %v416
        %457 = vmatprep.subr.bf16.mxu0 %v421
        %458 = vmatpush1.bf16.msra.mxu0 %v420
        %459 = vmatprep.subr.bf16.mxu0 %v425
        %460 = vmatpush1.bf16.msra.mxu0 %v424
        %461 = vmatprep.subr.bf16.mxu0 %v429
        %462 = vmatpush1.bf16.msra.mxu0 %v428
        %463 = vmatprep.subr.bf16.mxu0 0
        %464 = vmatpush1.bf16.msra.mxu0 0
        %465 = vmatprep.subr.bf16.mxu0 0
        %466 = vmatpush1.bf16.msra.mxu0 0
        %467 = vmatprep.subr.bf16.mxu0 0
        %468 = vmatpush1.bf16.msra.mxu0 0
        %469 = vmatprep.subr.bf16.mxu0 0
        %470 = vmatpush1.bf16.msra.mxu0 0
        %471 = vmatprep.subr.bf16.mxu0 0
        %472 = vmatpush1.bf16.msra.mxu0 0
        %473 = vmatprep.subr.bf16.mxu0 0
        %474 = vmatpush1.bf16.msra.mxu0 0
        %475 = vmatprep.subr.bf16.mxu0 0
        %476 = vmatpush1.bf16.msra.mxu0 0
        %477 = vmatprep.subr.bf16.mxu0 0
        %478 = vmatpush1.bf16.msra.mxu0 0
        %479 = vmatprep.subr.bf16.mxu0 0
        %480 = vmatpush1.bf16.msra.mxu0 0
        %481 = vmatprep.subr.bf16.mxu0 0
        %482 = vmatpush1.bf16.msra.mxu0 0
        %483 = vmatprep.subr.bf16.mxu0 0
        %484 = vmatpush1.bf16.msra.mxu0 0
        %485 = vmatprep.subr.bf16.mxu0 0
        %486 = vmatpush1.bf16.msra.mxu0 0
        %487 = vmatprep.mubr.bf16.mxu0 0
        %488 = vmatmul.mubr.bf16.gmra.mrb[0].mxu0 %v450
        %v489 = vpop.f32.mrb[0].mxu0
        %v490 = vadd.f32 %v351, %v489
        %v491 = vpop.f32.mrb[0].mxu0
        %v492 = vadd.f32 %v355, %v491
        %v493 = vpop.f32.mrb[0].mxu0
        %v494 = vadd.f32 %v351, %v493
        %v495 = vpop.f32.mrb[0].mxu0
        %v496 = vadd.f32 %v355, %v495
        %497 = vmatprep.mubr.bf16.mxu0 0
        %498 = vmatmul.mubr.bf16.gmra.mrb[0].mxu0 %v453
        %v499 = vpop.f32.mrb[0].mxu0
        %v500 = vadd.f32 %v351, %v499
        %v501 = vpop.f32.mrb[0].mxu0
        %v502 = vadd.f32 %v355, %v501
        %v503 = vpop.f32.mrb[0].mxu0
        %v504 = vadd.f32 %v351, %v503
        %v505 = vpop.f32.mrb[0].mxu0
        %v506 = vadd.f32 %v355, %v505
        %507 = vdwg.mxu0
        %508 = vmatprep.subr.bf16.mxu0 %v419
        %509 = vmatpush1.bf16.msra.mxu0 %v418
        %510 = vmatprep.subr.bf16.mxu0 %v423
        %511 = vmatpush1.bf16.msra.mxu0 %v422
        %512 = vmatprep.subr.bf16.mxu0 %v427
        %513 = vmatpush1.bf16.msra.mxu0 %v426
        %514 = vmatprep.subr.bf16.mxu0 %v431
        %515 = vmatpush1.bf16.msra.mxu0 %v430
        %516 = vmatprep.subr.bf16.mxu0 0
        %517 = vmatpush1.bf16.msra.mxu0 0
        %518 = vmatprep.subr.bf16.mxu0 0
        %519 = vmatpush1.bf16.msra.mxu0 0
        %520 = vmatprep.subr.bf16.mxu0 0
        %521 = vmatpush1.bf16.msra.mxu0 0
        %522 = vmatprep.subr.bf16.mxu0 0
        %523 = vmatpush1.bf16.msra.mxu0 0
        %524 = vmatprep.subr.bf16.mxu0 0
        %525 = vmatpush1.bf16.msra.mxu0 0
        %526 = vmatprep.subr.bf16.mxu0 0
        %527 = vmatpush1.bf16.msra.mxu0 0
        %528 = vmatprep.subr.bf16.mxu0 0
        %529 = vmatpush1.bf16.msra.mxu0 0
        %530 = vmatprep.subr.bf16.mxu0 0
        %531 = vmatpush1.bf16.msra.mxu0 0
        %532 = vmatprep.subr.bf16.mxu0 0
        %533 = vmatpush1.bf16.msra.mxu0 0
        %534 = vmatprep.subr.bf16.mxu0 0
        %535 = vmatpush1.bf16.msra.mxu0 0
        %536 = vmatprep.subr.bf16.mxu0 0
        %537 = vmatpush1.bf16.msra.mxu0 0
        %538 = vmatprep.subr.bf16.mxu0 0
        %539 = vmatpush1.bf16.msra.mxu0 0
        %540 = vmatprep.mubr.bf16.mxu0 0
        %541 = vmatmul.mubr.bf16.gmra.mrb[0].mxu0 %v450
        %v542 = vpop.f32.mrb[0].mxu0
        %v543 = vadd.f32 %v359, %v542
        %v544 = vpop.f32.mrb[0].mxu0
        %v545 = vadd.f32 %v363, %v544
        %v546 = vpop.f32.mrb[0].mxu0
        %v547 = vadd.f32 %v359, %v546
        %v548 = vpop.f32.mrb[0].mxu0
        %v549 = vadd.f32 %v363, %v548
        %550 = vmatprep.mubr.bf16.mxu0 0
        %551 = vmatmul.mubr.bf16.gmra.mrb[0].mxu0 %v453
        %v552 = vpop.f32.mrb[0].mxu0
        %v553 = vadd.f32 %v359, %v552
        %v554 = vpop.f32.mrb[0].mxu0
        %v555 = vadd.f32 %v363, %v554
        %v556 = vpop.f32.mrb[0].mxu0
        %v557 = vadd.f32 %v359, %v556
        %v558 = vpop.f32.mrb[0].mxu0
        %v559 = vadd.f32 %v363, %v558
        %560 = vdwg.mxu0
        %v561 = vld [vmem:[%s246] sm:$0xff]
        %v562 = vld [vmem:[%s246 + $0x8] sm:$0xff]
        %v563 = vld [vmem:[%s246 + $0x10] sm:$0xff]
        %v564 = vld [vmem:[%s246 + $0x18] sm:$0xff]
        %v565 = vld [vmem:[%s246 + $0x20] sm:$0xff]
        %v566 = vld [vmem:[%s246 + $0x28] sm:$0xff]
        %v567 = vld [vmem:[%s246 + $0x30] sm:$0xff]
        %v568 = vld [vmem:[%s246 + $0x38] sm:$0xff]
        %v569 = vmul.f32 %v561, %v543
        %v570 = vmul.f32 %v562, %v545
        %v571 = vmul.f32 %v563, %v547
        %v572 = vmul.f32 %v564, %v549
        %v573 = vmul.f32 %v565, %v553
        %v574 = vmul.f32 %v566, %v555
        %v575 = vmul.f32 %v567, %v557
        %v576 = vmul.f32 %v568, %v559
        %v577 = vadd.f32 %v569, %v490
        %v578 = vadd.f32 %v570, %v492
        %v579 = vadd.f32 %v571, %v494
        %v580 = vadd.f32 %v572, %v496
        %v581 = vadd.f32 %v573, %v500
        %v582 = vadd.f32 %v574, %v502
        %v583 = vadd.f32 %v575, %v504
        %v584 = vadd.f32 %v576, %v506
        %585 = vst [vmem:[%s288] sm:$0xff] %v577
        %586 = vst [vmem:[%s288 + $0x8] sm:$0xff] %v578
        %587 = vst [vmem:[%s288 + $0x10] sm:$0xff] %v579
        %588 = vst [vmem:[%s288 + $0x18] sm:$0xff] %v580
        %589 = vst [vmem:[%s288 + $0x20] sm:$0xff] %v581
        %590 = vst [vmem:[%s288 + $0x28] sm:$0xff] %v582
        %591 = vst [vmem:[%s288 + $0x30] sm:$0xff] %v583
        %592 = vst [vmem:[%s288 + $0x38] sm:$0xff] %v584
        %s593 = sand.u32 %s142, 1
        %s594 = scalar_lea.sflag [#allocation4], %s593
        %s595 = sand.u32 %s142, 1
        %s596 = smul.addr %s595, 64
        %s597 = scalar_lea.vmem [#allocation8], %s596
        // Predicated region
        $region49: #{modulation_forward.1} parent=35 // pred_check
          %p598 = pneg %p152
        $region50: #{modulation_forward.1} parent=35 // pred_check_branch
          %600 = sbr.rel (%p598) target = $region52
        $region51: #{modulation_forward.1} parent=35 // pred_region
          %s601 = smul.u32 4, %s28
          %s602 = smul.u32 2, %s29
          %s604 = ssub.s32 1024, 1024
          %605 = vsyncadd %s594, %s604
          %s606 = smul.addr %s601, 2
          %s607 = sadd.s32 %s602, %s606
          %s608 = smul.addr %s607, 128
          %s609 = scalar_lea.hbm %s4, %s608
          %s610 = sshll.u32 %s597, 4
          %s611 = int_to_ptr.vmem [resolvable:$true] %s610
          %616 = dma.vmem_to_hbm [thread:$0]  %s611, 1024, %s609, %s594, 256, 256, 16
        $region52: #{modulation_forward.1} parent=35 // pred_fallthru
          _
      $region36: #{modulation_forward.1} parent=5 // pred_fallthru
        _
      %p617 = scmp.le.s32.totalorder 2, %s19
      // Predicated region
      $region53: #{modulation_forward.1} parent=5 // pred_check
        %p618 = pneg %p617
      $region54: #{modulation_forward.1} parent=5 // pred_check_branch
        %620 = sbr.rel (%p618) target = $region56
      $region55: #{modulation_forward.1} parent=5 // pred_region
        %s621 = ssub.s32 %s19, 2
        // Predicated region
        $region57: #{modulation_forward.1} parent=55 // pred_check
          %p622 = pneg %p158
        $region58: #{modulation_forward.1} parent=55 // pred_check_branch
          %624 = sbr.rel (%p622) target = $region60
        $region59: #{modulation_forward.1} parent=55 // pred_region
          %s625 = sand.u32 %s143, 1
          %s626 = scalar_lea.sflag [#allocation4], %s625
          %s627 = sand.u32 %s143, 1
          %s628 = smul.addr %s627, 64
          %s629 = scalar_lea.vmem [#allocation8], %s628
          %630 = dma.done %s626, 1024
        $region60: #{modulation_forward.1} parent=55 // pred_fallthru
          _
      $region56: #{modulation_forward.1} parent=5 // pred_fallthru
        _
    $region6: #{modulation_forward.1} parent=1 // loop_footer
      %s23 = sadd.s32 1, %s19
    $region7: #{modulation_forward.1} parent=1 // loop_footer_branch
      %18 = sbr.rel target = $region3
    $region8: #{modulation_forward.1} parent=1 // loop_exit
      _
    %631 = vsyncpa [#allocation3], 1
    %s632 = scalar_lea.sflag [#allocation3], 1
    %633 = vsyncpa %s632, 1
    %634 = vsyncpa [#allocation6], 1
    %s635 = scalar_lea.sflag [#allocation6], 1
    %636 = vsyncpa %s635, 1
    %637 = vsyncpa [#allocation4], 1
    %s638 = scalar_lea.sflag [#allocation4], 1
    %639 = vsyncpa %s638, 1

</llo_original>
